<compile_context>
chip_gen: v7x
topology: tpu7x:2x2x1
jax: 0.10.0
libtpu: 0.0.40
codegen_flags: <defaults>
</compile_context>

<pallas_src>
import functools

import jax
import jax.numpy as jnp
from jax.experimental import pallas as pl
from jax.experimental.pallas import tpu as pltpu

_LANE = 128
_SUBLANE = 8
_MAX_BLOCK_ROWS = 4096                # (4096,128) f32 tile = 2 MiB / input / buffer
_VMEM_LIMIT_BYTES = 40 * 1024 * 1024  # explicit scoped-VMEM budget (covers v5e)


def _num_core_splits():
    # 2-way split only pays off on chips with 2 TensorCores per chip (v7x);
    # on v5e/v6e the leading axis would just be a sequential outer loop.
    try:
        kind = jax.devices()[0].device_kind.lower()
    except Exception:
        return 1
    return 2 if "v7" in kind else 1


def _dice_partial_kernel(logits_ref, targets_ref, out_ref, *,
                         inner_steps, total_blocks, num_full_blocks,
                         tail_valid, block_rows):
    c = pl.program_id(0)                  # core-split index ("parallel")
    i = pl.program_id(1)                  # streaming/reduction index ("arbitrary")
    linear_step = c * inner_steps + i     # logical (unclamped) block id

    @pl.when(i == 0)
    def _():
        out_ref[...] = jnp.zeros_like(out_ref)

    def accumulate(th, t):
        # VPU-only accumulation into vreg-shaped (8,128) slabs; cross-lane
        # reduction is deferred to the wrapper.
        out_ref[0] += (th * t).reshape(-1, _SUBLANE, _LANE).sum(axis=0)
        out_ref[1] += th.reshape(-1, _SUBLANE, _LANE).sum(axis=0)
        out_ref[2] += t.reshape(-1, _SUBLANE, _LANE).sum(axis=0)

    # Fast path: fully-valid interior blocks, no masking.
    @pl.when(linear_step < num_full_blocks)
    def _():
        x = logits_ref[...].astype(jnp.float32)
        t = targets_ref[...].astype(jnp.float32)
        accumulate(jnp.tanh(0.5 * x), t)

    # Tail block (if any): mask elements past the true element count before
    # any reduction (the OOB part of a boundary block holds unspecified data,
    # and padded zeros would otherwise pollute sum(p) via sigmoid(0)=0.5).
    if tail_valid is not None:
        @pl.when(linear_step == total_blocks - 1)
        def _():
            x = logits_ref[...].astype(jnp.float32)
            t = targets_ref[...].astype(jnp.float32)
            th = jnp.tanh(0.5 * x)
            row = jax.lax.broadcasted_iota(jnp.int32, (block_rows, _LANE), 0)
            lane = jax.lax.broadcasted_iota(jnp.int32, (block_rows, _LANE), 1)
            valid = (row * _LANE + lane) < tail_valid
            accumulate(jnp.where(valid, th, 0.0), jnp.where(valid, t, 0.0))

    # Blocks with linear_step >= total_blocks (clamped duplicates on the
    # core-split axis) fall through both branches and contribute zero.


def dice_loss_from_logits(logits, targets, smooth=1e-6,
                          max_block_rows=_MAX_BLOCK_ROWS):
    """Pallas TPU implementation of DiceLoss_fromLogits.forward."""
    logits_flat = jnp.reshape(logits, (-1,))
    targets_flat = jnp.reshape(targets, (-1,))
    n = logits_flat.shape[0]

    # Minimal pad: only to a multiple of 8*128 so the flat vector reshapes to
    # a lane-dense (rows, 128) slab with rows % 8 == 0. Padded / OOB elements
    # are masked inside the kernel (tail block only).
    min_chunk = _SUBLANE * _LANE
    n_pad = ((n + min_chunk - 1) // min_chunk) * min_chunk
    if n_pad != n:
        logits_flat = jnp.pad(logits_flat, (0, n_pad - n))
        targets_flat = jnp.pad(targets_flat, (0, n_pad - n))

    rows = n_pad // _LANE
    logits_2d = logits_flat.reshape(rows, _LANE)
    targets_2d = targets_flat.reshape(rows, _LANE)

    block_rows = min(max_block_rows, rows)      # multiple of 8 by construction
    block_elems = block_rows * _LANE
    total_blocks = -(-rows // block_rows)
    num_splits = _num_core_splits()
    inner_steps = -(-total_blocks // num_splits)
    grid = (num_splits, inner_steps)

    # Tail-block bookkeeping (static Python ints at trace time).
    if n == total_blocks * block_elems:
        tail_valid = None                       # no masking needed anywhere
        num_full_blocks = total_blocks
    else:
        tail_valid = n - (total_blocks - 1) * block_elems   # < block_elems
        num_full_blocks = total_blocks - 1

    def in_map(c, i):
        # Clamp so duplicated boundary steps on the split axis re-read a valid
        # block; the kernel zeros their contribution via the unclamped step id.
        return (jnp.minimum(c * inner_steps + i, total_blocks - 1), 0)

    kernel = functools.partial(
        _dice_partial_kernel,
        inner_steps=inner_steps,
        total_blocks=total_blocks,
        num_full_blocks=num_full_blocks,
        tail_valid=tail_valid,
        block_rows=block_rows,
    )

    partials = pl.pallas_call(
        kernel,
        out_shape=jax.ShapeDtypeStruct(
            (num_splits, 3, _SUBLANE, _LANE), jnp.float32),
        grid_spec=pltpu.PrefetchScalarGridSpec(
            num_scalar_prefetch=0,
            grid=grid,
            in_specs=[
                pl.BlockSpec((block_rows, _LANE), in_map),
                pl.BlockSpec((block_rows, _LANE), in_map),
            ],
            out_specs=pl.BlockSpec((None, 3, _SUBLANE, _LANE),
                                   lambda c, i: (c, 0, 0, 0)),
        ),
        compiler_params=pltpu.CompilerParams(
            # TODO(synk): on v7x, verify the c axis shards across TensorCores;
            # switch to pltpu.CORE_PARALLEL if the Mosaic dump shows it doesn't.
            dimension_semantics=("parallel", "arbitrary"),
            vmem_limit_bytes=_VMEM_LIMIT_BYTES,
        ),
    )(logits_2d, targets_2d)

    # Tiny final cross-lane reduction + deferred sigmoid affine in plain JAX.
    s_tt = jnp.sum(partials[:, 0])       # sum(tanh(x/2) * t)
    s_tanh = jnp.sum(partials[:, 1])     # sum(tanh(x/2))
    s_t = jnp.sum(partials[:, 2])        # sum(t)
    inter = 0.5 * (s_tt + s_t)           # sum(sigmoid(x) * t)
    probs_sum = 0.5 * s_tanh + 0.5 * n   # sum(sigmoid(x)) over the n valid elems
    smooth = jnp.float32(smooth)
    dice = (2.0 * inter + smooth) / (probs_sum + s_t + smooth)
    return 1.0 - dice


def _reference(logits, targets, smooth=1e-6):
    p = jax.nn.sigmoid(logits.astype(jnp.float32)).reshape(-1)
    t = targets.astype(jnp.float32).reshape(-1)
    inter = jnp.sum(p * t)
    dice = (2.0 * inter + smooth) / (jnp.sum(p) + jnp.sum(t) + smooth)
    return 1.0 - dice


if __name__ == "__main__":
    key = jax.random.PRNGKey(0)
    k1, k2, k3, k4 = jax.random.split(key, 4)

    # NCHW logits and binary target masks (small segmentation-like shape).
    logits = jax.random.normal(k1, (2, 4, 16, 16), dtype=jnp.float32)
    targets = (jax.random.uniform(k2, (2, 4, 16, 16)) > 0.5).astype(jnp.float32)
    loss = jax.block_until_ready(dice_loss_from_logits(logits, targets))
    ref = _reference(logits, targets)
    assert jnp.allclose(loss, ref, atol=1e-5, rtol=1e-5), (loss, ref)

    # Ragged element count to exercise the masked tail-block path.
    logits2 = jax.random.normal(k3, (3, 5, 7, 9), dtype=jnp.float32)
    targets2 = (jax.random.uniform(k4, (3, 5, 7, 9)) > 0.5).astype(jnp.float32)
    loss2 = jax.block_until_ready(dice_loss_from_logits(logits2, targets2))
    ref2 = _reference(logits2, targets2)
    assert jnp.allclose(loss2, ref2, atol=1e-5, rtol=1e-5), (loss2, ref2)

    print("KERNEL_OK")
</pallas_src>

<mosaic_0001>
module attributes {stable_mosaic.version = 11 : i64} {
  func.func @_dice_partial_kernel(%arg0: i32, %arg1: i32, %arg2: memref<16x128xf32, #tpu.memory_space<vmem>>, %arg3: memref<16x128xf32, #tpu.memory_space<vmem>>, %arg4: memref<1x3x8x128xf32, #tpu.memory_space<vmem>>) attributes {dimension_semantics = [#tpu.dimension_semantics<parallel>, #tpu.dimension_semantics<arbitrary>], iteration_bounds = array<i64: 1, 1>, scalar_prefetch = 0 : i64, scratch_operands = 0 : i64, tpu.core_type = #tpu.core_type<tc>, window_params = [{transform_indices = @transform_0, window_bounds = array<i64: 16, 128>}, {transform_indices = @transform_1, window_bounds = array<i64: 16, 128>}, {transform_indices = @transform_2, window_bounds = array<i64: 1, 3, 8, 128>}]} {
    %c1_i32 = arith.constant 1 : i32
    %0 = arith.muli %arg0, %c1_i32 : i32
    %1 = arith.addi %0, %arg1 : i32
    %c0_i32 = arith.constant 0 : i32
    %2 = arith.cmpi eq, %arg1, %c0_i32 : i32
    %3 = arith.extui %2 : i1 to i32
    %c0_i32_0 = arith.constant 0 : i32
    %4 = arith.cmpi ne, %3, %c0_i32_0 : i32
    scf.if %4 {
      %cst = arith.constant 0.000000e+00 : f32
      %8 = vector.broadcast %cst : f32 to vector<3x8x128xf32>
      %c0 = arith.constant 0 : index
      %c0_3 = arith.constant 0 : index
      %c0_4 = arith.constant 0 : index
      %c0_5 = arith.constant 0 : index
      %9 = vector.load %arg4[%c0, %c0_3, %c0_4, %c0_5] : memref<1x3x8x128xf32, #tpu.memory_space<vmem>>, vector<1x3x8x128xf32>
      %10 = vector.shape_cast %9 : vector<1x3x8x128xf32> to vector<3x8x128xf32>
      %11 = vector.shape_cast %8 : vector<3x8x128xf32> to vector<1x3x8x128xf32>
      tpu.vector_store %arg4[%c0, %c0_3, %c0_4, %c0_5], %11 {strides = array<i32>} : memref<1x3x8x128xf32, #tpu.memory_space<vmem>>, vector<1x3x8x128xf32>,
    } else {
    }
    %c1_i32_1 = arith.constant 1 : i32
    %5 = arith.cmpi slt, %1, %c1_i32_1 : i32
    %6 = arith.extui %5 : i1 to i32
    %c0_i32_2 = arith.constant 0 : i32
    %7 = arith.cmpi ne, %6, %c0_i32_2 : i32
    scf.if %7 {
      %c0 = arith.constant 0 : index
      %c0_3 = arith.constant 0 : index
      %8 = vector.load %arg2[%c0, %c0_3] : memref<16x128xf32, #tpu.memory_space<vmem>>, vector<16x128xf32>
      %c0_4 = arith.constant 0 : index
      %c0_5 = arith.constant 0 : index
      %9 = vector.load %arg3[%c0_4, %c0_5] : memref<16x128xf32, #tpu.memory_space<vmem>>, vector<16x128xf32>
      %cst = arith.constant 5.000000e-01 : f32
      %10 = vector.broadcast %cst : f32 to vector<16x128xf32>
      %11 = arith.mulf %10, %8 : vector<16x128xf32>
      %12 = math.tanh %11 : vector<16x128xf32>
      %c0_6 = arith.constant 0 : index
      %c0_7 = arith.constant 0 : index
      %c0_8 = arith.constant 0 : index
      %c0_9 = arith.constant 0 : index
      %13 = vector.load %arg4[%c0_6, %c0_7, %c0_8, %c0_9] : memref<1x3x8x128xf32, #tpu.memory_space<vmem>>, vector<1x1x8x128xf32>
      %14 = vector.shape_cast %13 : vector<1x1x8x128xf32> to vector<8x128xf32>
      %15 = arith.mulf %12, %9 : vector<16x128xf32>
      %16 = vector.shape_cast %15 : vector<16x128xf32> to vector<2x8x128xf32>
      %cst_10 = arith.constant dense<0.000000e+00> : vector<8x128xf32>
      %17 = vector.multi_reduction <add>, %16, %cst_10 [0] : vector<2x8x128xf32> to vector<8x128xf32>
      %18 = arith.addf %14, %17 : vector<8x128xf32>
      %c0_11 = arith.constant 0 : index
      %c0_12 = arith.constant 0 : index
      %c0_13 = arith.constant 0 : index
      %c0_14 = arith.constant 0 : index
      %19 = vector.load %arg4[%c0_11, %c0_12, %c0_13, %c0_14] : memref<1x3x8x128xf32, #tpu.memory_space<vmem>>, vector<1x1x8x128xf32>
      %20 = vector.shape_cast %19 : vector<1x1x8x128xf32> to vector<8x128xf32>
      %21 = vector.shape_cast %18 : vector<8x128xf32> to vector<1x1x8x128xf32>
      tpu.vector_store %arg4[%c0_11, %c0_12, %c0_13, %c0_14], %21 {strides = array<i32>} : memref<1x3x8x128xf32, #tpu.memory_space<vmem>>, vector<1x1x8x128xf32>,
      %c0_15 = arith.constant 0 : index
      %c1 = arith.constant 1 : index
      %c0_16 = arith.constant 0 : index
      %c0_17 = arith.constant 0 : index
      %22 = vector.load %arg4[%c0_15, %c1, %c0_16, %c0_17] : memref<1x3x8x128xf32, #tpu.memory_space<vmem>>, vector<1x1x8x128xf32>
      %23 = vector.shape_cast %22 : vector<1x1x8x128xf32> to vector<8x128xf32>
      %24 = vector.shape_cast %12 : vector<16x128xf32> to vector<2x8x128xf32>
      %cst_18 = arith.constant dense<0.000000e+00> : vector<8x128xf32>
      %25 = vector.multi_reduction <add>, %24, %cst_18 [0] : vector<2x8x128xf32> to vector<8x128xf32>
      %26 = arith.addf %23, %25 : vector<8x128xf32>
      %c0_19 = arith.constant 0 : index
      %c1_20 = arith.constant 1 : index
      %c0_21 = arith.constant 0 : index
      %c0_22 = arith.constant 0 : index
      %27 = vector.load %arg4[%c0_19, %c1_20, %c0_21, %c0_22] : memref<1x3x8x128xf32, #tpu.memory_space<vmem>>, vector<1x1x8x128xf32>
      %28 = vector.shape_cast %27 : vector<1x1x8x128xf32> to vector<8x128xf32>
      %29 = vector.shape_cast %26 : vector<8x128xf32> to vector<1x1x8x128xf32>
      tpu.vector_store %arg4[%c0_19, %c1_20, %c0_21, %c0_22], %29 {strides = array<i32>} : memref<1x3x8x128xf32, #tpu.memory_space<vmem>>, vector<1x1x8x128xf32>,
      %c0_23 = arith.constant 0 : index
      %c2 = arith.constant 2 : index
      %c0_24 = arith.constant 0 : index
      %c0_25 = arith.constant 0 : index
      %30 = vector.load %arg4[%c0_23, %c2, %c0_24, %c0_25] : memref<1x3x8x128xf32, #tpu.memory_space<vmem>>, vector<1x1x8x128xf32>
      %31 = vector.shape_cast %30 : vector<1x1x8x128xf32> to vector<8x128xf32>
      %32 = vector.shape_cast %9 : vector<16x128xf32> to vector<2x8x128xf32>
      %cst_26 = arith.constant dense<0.000000e+00> : vector<8x128xf32>
      %33 = vector.multi_reduction <add>, %32, %cst_26 [0] : vector<2x8x128xf32> to vector<8x128xf32>
      %34 = arith.addf %31, %33 : vector<8x128xf32>
      %c0_27 = arith.constant 0 : index
      %c2_28 = arith.constant 2 : index
      %c0_29 = arith.constant 0 : index
      %c0_30 = arith.constant 0 : index
      %35 = vector.load %arg4[%c0_27, %c2_28, %c0_29, %c0_30] : memref<1x3x8x128xf32, #tpu.memory_space<vmem>>, vector<1x1x8x128xf32>
      %36 = vector.shape_cast %35 : vector<1x1x8x128xf32> to vector<8x128xf32>
      %37 = vector.shape_cast %34 : vector<8x128xf32> to vector<1x1x8x128xf32>
      tpu.vector_store %arg4[%c0_27, %c2_28, %c0_29, %c0_30], %37 {strides = array<i32>} : memref<1x3x8x128xf32, #tpu.memory_space<vmem>>, vector<1x1x8x128xf32>,
    } else {
    }
    return
  }
  func.func @transform_0(%arg0: i32, %arg1: i32) -> (i32, i32) {
    %c1_i32 = arith.constant 1 : i32
    %0 = arith.muli %arg0, %c1_i32 : i32
    %1 = arith.addi %0, %arg1 : i32
    %c0_i32 = arith.constant 0 : i32
    %2 = arith.minsi %1, %c0_i32 : i32
    %c0_i32_0 = arith.constant 0 : i32
    %c0_i32_1 = arith.constant 0 : i32
    return %2, %c0_i32_0 : i32, i32
  }
  func.func @transform_1(%arg0: i32, %arg1: i32) -> (i32, i32) {
    %c1_i32 = arith.constant 1 : i32
    %0 = arith.muli %arg0, %c1_i32 : i32
    %1 = arith.addi %0, %arg1 : i32
    %c0_i32 = arith.constant 0 : i32
    %2 = arith.minsi %1, %c0_i32 : i32
    %c0_i32_0 = arith.constant 0 : i32
    %c0_i32_1 = arith.constant 0 : i32
    return %2, %c0_i32_0 : i32, i32
  }
  func.func @transform_2(%arg0: i32, %arg1: i32) -> (i32, i32, i32, i32) {
    %c0_i32 = arith.constant 0 : i32
    %c0_i32_0 = arith.constant 0 : i32
    %c0_i32_1 = arith.constant 0 : i32
    %c0_i32_2 = arith.constant 0 : i32
    return %arg0, %c0_i32, %c0_i32_0, %c0_i32_1 : i32, i32, i32, i32
  }
}

</mosaic_0001>

<llo_original>
// kernel: tpu_custom_call.1
$region0: #{tpu_custom_call.1}
  #allocation0 [shape = 'u32[]', space=smem, size = 0x4, offset = 0x4, fixed_abs, tag = 'smem constant byte address 0x4 - core index']
  #allocation1 [shape = 'u32[144,128]{1,0:T(1,128)}', space=vmem, size = 0x12000, scoped, tag = 'internal scratch']
  %s0 = inlined_call_operand.hbm [shape: f32[16,128], index: 0, kind: input, shape index: {}]
  %s1 = inlined_call_operand.hbm [shape: f32[16,128], index: 1, kind: input, shape index: {}]
  %s2 = inlined_call_operand.hbm [shape: f32[1,3,8,128], index: 2, kind: output, shape index: {}]
  %s3 = sld [smem:[#allocation0]]
  $region34: #{tpu_custom_call.1} parent=0
    _
  %s5 = ssub.s32 1, %s3
  %s6 = scalar_select 0, %s5, %s3
  $region1: #{tpu_custom_call.1} parent=0
    #allocation2 [shape = 'u8[8192]{0}', space=vmem, size = 0x2000, scoped, tag = 'input window, operand 0, single buffered']
    #allocation3 [shape = 's32[1]{0}', space=sflag, size = 0x4, scoped, tag = 'scoped memory for tpu_custom_call.1']
    #allocation4 [shape = 's32[1]{0}', space=sflag, size = 0x4, scoped, tag = 'scoped memory for tpu_custom_call.1']
    #allocation5 [shape = 'u8[8192]{0}', space=vmem, size = 0x2000, scoped, tag = 'input window, operand 1, single buffered']
    #allocation6 [shape = 's32[1]{0}', space=sflag, size = 0x4, scoped, tag = 'scoped memory for tpu_custom_call.1']
    #allocation7 [shape = 'u8[12288]{0}', space=vmem, size = 0x3000, scoped, tag = 'output window, operand 0, single buffered']
    %7 = vsyncpa [#allocation3], 0
    %8 = vsyncpa [#allocation6], 0
    %9 = vsyncpa [#allocation4], 0
    // Predicated region
    $region2: #{tpu_custom_call.1} parent=1 // pred_check
      _
    $region3: #{tpu_custom_call.1} parent=1 // pred_check_branch
      %11 = sbr.rel (0) target = $region5
    $region4: #{tpu_custom_call.1} parent=1 // pred_region
      %s12 = sadd.s32 0, 0
      %p13 = scmp.lt.s32.totalorder %s12, 0
      %s14 = scalar_select %p13, %s12, 0
      %s15 = smul.u32 2, %s14
      %s17 = ssub.s32 256, 256
      %18 = vsyncadd [#allocation3], %s17
      %s19 = smul.addr %s15, 128
      %s20 = scalar_lea.hbm %s0, %s19
      %s21 = sshll.u32 [#allocation2], 4
      %s22 = int_to_ptr.vmem [resolvable:$true] %s21
      %27 = dma.hbm_to_vmem [thread:$0]  %s20, 256, %s22, [#allocation3], 128, 128, 8
    $region5: #{tpu_custom_call.1} parent=1 // pred_fallthru
      _
    // Predicated region
    $region6: #{tpu_custom_call.1} parent=1 // pred_check
      _
    $region7: #{tpu_custom_call.1} parent=1 // pred_check_branch
      %29 = sbr.rel (0) target = $region9
    $region8: #{tpu_custom_call.1} parent=1 // pred_region
      %s30 = sadd.s32 0, 0
      %p31 = scmp.lt.s32.totalorder %s30, 0
      %s32 = scalar_select %p31, %s30, 0
      %s33 = smul.u32 2, %s32
      %s35 = ssub.s32 256, 256
      %36 = vsyncadd [#allocation6], %s35
      %s37 = smul.addr %s33, 128
      %s38 = scalar_lea.hbm %s1, %s37
      %s39 = sshll.u32 [#allocation5], 4
      %s40 = int_to_ptr.vmem [resolvable:$true] %s39
      %45 = dma.hbm_to_vmem [thread:$0]  %s38, 256, %s40, [#allocation6], 128, 128, 8
    $region9: #{tpu_custom_call.1} parent=1 // pred_fallthru
      _
    // Predicated region
    $region10: #{tpu_custom_call.1} parent=1 // pred_check
      _
    $region11: #{tpu_custom_call.1} parent=1 // pred_check_branch
      %47 = sbr.rel (0) target = $region13
    $region12: #{tpu_custom_call.1} parent=1 // pred_region
      %48 = dma.done [#allocation3], 256
    $region13: #{tpu_custom_call.1} parent=1 // pred_fallthru
      _
    // Predicated region
    $region14: #{tpu_custom_call.1} parent=1 // pred_check
      _
    $region15: #{tpu_custom_call.1} parent=1 // pred_check_branch
      %50 = sbr.rel (0) target = $region17
    $region16: #{tpu_custom_call.1} parent=1 // pred_region
      %51 = dma.done [#allocation6], 256
    $region17: #{tpu_custom_call.1} parent=1 // pred_fallthru
      _
    %s52 = sadd.s32 0, 0
    %p53 = scmp.lt.s32.totalorder %s52, 0
    %s54 = scalar_select %p53, %s52, 0
    %s55 = smul.u32 2, %s54
    %s56 = sadd.s32 0, 0
    %p57 = scmp.lt.s32.totalorder %s56, 0
    %s58 = scalar_select %p57, %s56, 0
    %s59 = smul.u32 2, %s58
    %s60 = sadd.s32 0, 0
    %p61 = scmp.eq.s32.totalorder 0, 0
    // Predicated region
    $region18: #{tpu_custom_call.1} parent=1 // pred_check
      %p62 = pneg %p61
    $region19: #{tpu_custom_call.1} parent=1 // pred_check_branch
      %64 = sbr.rel (%p62) target = $region21
    $region20: #{tpu_custom_call.1} parent=1 // pred_region
      %65 = vst [vmem:[#allocation7] sm:$0xff] 0.0
      %66 = vst [vmem:[#allocation7 + $0x8] sm:$0xff] 0.0
      %67 = vst [vmem:[#allocation7 + $0x10] sm:$0xff] 0.0
    $region21: #{tpu_custom_call.1} parent=1 // pred_fallthru
      _
    %p68 = scmp.lt.s32.totalorder %s60, 1
    // Predicated region
    $region22: #{tpu_custom_call.1} parent=1 // pred_check
      %p69 = pneg %p68
    $region23: #{tpu_custom_call.1} parent=1 // pred_check_branch
      %71 = sbr.rel (%p69) target = $region25
    $region24: #{tpu_custom_call.1} parent=1 // pred_region
      %v72 = vld [vmem:[#allocation2] sm:$0xff]
      %v73 = vld [vmem:[#allocation2 + $0x8] sm:$0xff]
      %v74 = vld [vmem:[#allocation5] sm:$0xff]
      %v75 = vld [vmem:[#allocation5 + $0x8] sm:$0xff]
      %v76 = vmul.f32 %v72, 0.5
      %v77 = vmul.f32 %v73, 0.5
      %v78 = vtanh.pop %v76
      %v79 = vtanh.pop %v77
      %v80 = vld [vmem:[#allocation7] sm:$0xff]
      %v81 = vmul.f32 %v78, %v74
      %v82 = vmul.f32 %v79, %v75
      %v83 = vadd.f32 %v81, %v82
      %v84 = vadd.f32 %v80, %v83
      %85 = vst [vmem:[#allocation7] sm:$0xff] %v84
      %s86 = scalar_lea.vmem [#allocation7], 8
      %v87 = vld [vmem:[%s86] sm:$0xff]
      %v88 = vadd.f32 %v78, %v79
      %v89 = vadd.f32 %v87, %v88
      %90 = vst [vmem:[%s86] sm:$0xff] %v89
      %s91 = scalar_lea.vmem [#allocation7], 16
      %v92 = vld [vmem:[%s91] sm:$0xff]
      %v93 = vadd.f32 %v74, %v75
      %v94 = vadd.f32 %v92, %v93
      %95 = vst [vmem:[%s91] sm:$0xff] %v94
    $region25: #{tpu_custom_call.1} parent=1 // pred_fallthru
      _
    // Predicated region
    $region26: #{tpu_custom_call.1} parent=1 // pred_check
      _
    $region27: #{tpu_custom_call.1} parent=1 // pred_check_branch
      %97 = sbr.rel (0) target = $region29
    $region28: #{tpu_custom_call.1} parent=1 // pred_region
      %s99 = ssub.s32 384, 384
      %100 = vsyncadd [#allocation4], %s99
      %s101 = sshll.u32 [#allocation7], 4
      %s102 = int_to_ptr.vmem [resolvable:$true] %s101
      %107 = dma.vmem_to_hbm [thread:$0]  %s102, 384, %s2, [#allocation4], 128, 128, 8
    $region29: #{tpu_custom_call.1} parent=1 // pred_fallthru
      _
    // Predicated region
    $region30: #{tpu_custom_call.1} parent=1 // pred_check
      _
    $region31: #{tpu_custom_call.1} parent=1 // pred_check_branch
      %109 = sbr.rel (0) target = $region33
    $region32: #{tpu_custom_call.1} parent=1 // pred_region
      %110 = dma.done [#allocation4], 384
    $region33: #{tpu_custom_call.1} parent=1 // pred_fallthru
      _
    %111 = vsyncpa [#allocation3], 1
    %112 = vsyncpa [#allocation6], 1
    %113 = vsyncpa [#allocation4], 1

</llo_original>
